<compile_context>
chip_gen: v5e
topology: v5e:2x2
jax: 0.10.0
libtpu: 0.0.40
codegen_flags: <defaults>
</compile_context>

<pallas_src>
import jax
import jax.numpy as jnp
from jax.experimental import pallas as pl
from jax.experimental.pallas import tpu as pltpu


# ----------------------------------------------------------------------------
# Pallas kernel: fused 3-layer MLP (Linear -> ReLU -> Linear -> ReLU -> Linear)
# ----------------------------------------------------------------------------
def _discriminator_kernel(x_ref, w1_ref, b1_ref, w2_ref, b2_ref,
                          w3_ref, b3_ref, o_ref):
    # x tile: (TB, D_in) f32 in HBM/VMEM; cast to bf16 only at the MXU boundary.
    x = x_ref[...].astype(jnp.bfloat16)

    # Layer 1: Linear(D_in -> 256) + ReLU   (bf16 MXU, f32 accumulate)
    h1 = jnp.dot(x, w1_ref[...], preferred_element_type=jnp.float32)
    h1 = jnp.maximum(h1 + b1_ref[...], 0.0).astype(jnp.bfloat16)

    # Layer 2: spectral-normed Linear(256 -> 64) + ReLU
    h2 = jnp.dot(h1, w2_ref[...], preferred_element_type=jnp.float32)
    h2 = jnp.maximum(h2 + b2_ref[...], 0.0).astype(jnp.bfloat16)

    # Layer 3: spectral-normed Linear(64 -> z_dim), no activation
    h3 = jnp.dot(h2, w3_ref[...], preferred_element_type=jnp.float32)
    o_ref[...] = (h3 + b3_ref[...]).astype(o_ref.dtype)


# ----------------------------------------------------------------------------
# Wrapper
# ----------------------------------------------------------------------------
def _round_up(x, m):
    return (x + m - 1) // m * m


def _cdiv(a, b):
    return (a + b - 1) // b


def _choose_batch_tiling(B, block_b, min_steps=2):
    """Pick (TB, B_pad, n_steps).

    Guarantees: TB multiple of 8, TB <= block_b, n_steps >= min_steps (so both
    v7x TensorCores get work), and batch padding waste <= ~8 rows per step
    (no whole-tile blow-up from round_up(B, TB)).
    """
    B8 = _round_up(max(B, 1), 8)
    n = max(min_steps, _cdiv(B8, block_b))
    tb = _round_up(_cdiv(B8, n), 8)
    return tb, n * tb, n


def discriminator_forward(x, w1, b1, w2, b2, w3, b3, *, block_b=4096):
    """x: (B, D_in) f32. Weights: bf16 (in, out); biases: f32 (1, out).

    Returns (B, z_dim) f32.
    """
    B, D_in = x.shape
    H1 = w1.shape[1]      # 256
    H2 = w2.shape[1]      # 64
    Z = w3.shape[1]       # z_dim

    TB, B_pad, n_steps = _choose_batch_tiling(B, block_b)

    # Only the batch axis is ever padded (rows of zeros, sliced off at the end).
    if B_pad != B:
        x_in = jnp.zeros((B_pad, D_in), x.dtype).at[:B].set(x)
    else:
        x_in = x

    # Per-step VMEM footprint (double-buffered x/out tiles, resident weights,
    # f32+bf16 intermediates). Used to size the compiler's scoped-VMEM limit.
    vmem_est = (
        2 * TB * D_in * x_in.dtype.itemsize
        + 2 * TB * Z * 4
        + 2 * (w1.size + w2.size + w3.size) * 2
        + 2 * (b1.size + b2.size + b3.size) * 4
        + TB * H1 * (4 + 2)
        + TB * H2 * (4 + 2)
        + TB * Z * 4)
    vmem_limit = int(min(64 * 2**20, max(32 * 2**20, 2 * vmem_est)))

    flops = 2 * B_pad * (D_in * H1 + H1 * H2 + H2 * Z)
    bytes_accessed = (
        x_in.size * x_in.dtype.itemsize
        + (w1.size + w2.size + w3.size) * 2
        + (b1.size + b2.size + b3.size) * 4
        + B_pad * Z * 4)

    out = pl.pallas_call(
        _discriminator_kernel,
        out_shape=jax.ShapeDtypeStruct((B_pad, Z), jnp.float32),
        grid=(n_steps,),
        in_specs=[
            # x tile marches along the batch axis; full (unpadded) feature dim.
            pl.BlockSpec((TB, D_in), lambda i: (i, 0)),
            # Weights / biases resident in VMEM across all grid steps.
            pl.BlockSpec((D_in, H1), lambda i: (0, 0)),
            pl.BlockSpec((1, H1), lambda i: (0, 0)),
            pl.BlockSpec((H1, H2), lambda i: (0, 0)),
            pl.BlockSpec((1, H2), lambda i: (0, 0)),
            pl.BlockSpec((H2, Z), lambda i: (0, 0)),
            pl.BlockSpec((1, Z), lambda i: (0, 0)),
        ],
        out_specs=pl.BlockSpec((TB, Z), lambda i: (i, 0)),
        compiler_params=pltpu.CompilerParams(
            dimension_semantics=("parallel",),
            vmem_limit_bytes=vmem_limit),
        cost_estimate=pl.CostEstimate(
            flops=flops, transcendentals=0, bytes_accessed=bytes_accessed),
    )(x_in, w1, b1, w2, b2, w3, b3)

    return out[:B] if B_pad != B else out


# ----------------------------------------------------------------------------
# Parameter setup (plain JAX glue)
# ----------------------------------------------------------------------------
def _spectral_normalize(w_out_in, u0, n_iters=15, eps=1e-12):
    """PyTorch-style spectral norm on a (out, in) weight: W / sigma_max."""
    def body(_, carry):
        u, v = carry
        v = w_out_in.T @ u
        v = v / (jnp.linalg.norm(v) + eps)
        u = w_out_in @ v
        u = u / (jnp.linalg.norm(u) + eps)
        return (u, v)

    v0 = jnp.zeros((w_out_in.shape[1],), w_out_in.dtype)
    u, v = jax.lax.fori_loop(
        0, n_iters, body, (u0 / (jnp.linalg.norm(u0) + eps), v0))
    sigma = u @ (w_out_in @ v)
    return w_out_in / sigma


def make_params(key, state_dim, z_dim, featurize, feature_dim):
    """Deterministic synthetic init matching the module's shapes (f32)."""
    in_dim = feature_dim if featurize else state_dim
    k1, k2, k3, ku2, ku3 = jax.random.split(key, 5)

    def linear_init(k, fan_in, fan_out):
        bound = 1.0 / jnp.sqrt(jnp.float32(fan_in))
        kw, kb = jax.random.split(k)
        w = jax.random.uniform(kw, (fan_out, fan_in), jnp.float32, -bound, bound)
        b = jax.random.uniform(kb, (fan_out,), jnp.float32, -bound, bound)
        return w, b

    w1, b1 = linear_init(k1, in_dim, 256)
    w2, b2 = linear_init(k2, 256, 64)
    w3, b3 = linear_init(k3, 64, z_dim)

    # TODO(synk): PyTorch's spectral_norm keeps a persistent u and does one
    # power iteration per training forward; here we run 15 fresh iterations at
    # setup, so sigma differs slightly from a checkpoint-matched run.
    w2n = _spectral_normalize(w2, jax.random.normal(ku2, (64,), jnp.float32))
    w3n = _spectral_normalize(w3, jax.random.normal(ku3, (z_dim,), jnp.float32))

    params = dict(
        w1=w1.T, b1=b1[None, :],
        w2n=w2n.T, b2=b2[None, :],
        w3n=w3n.T, b3=b3[None, :],
    )
    params["lambda_metra"] = jnp.float32(30.0)  # unused in forward
    return params


def prepare_kernel_params(params):
    """One-time cast to the kernel's dtypes (bf16 weights, f32 biases).

    Done once at setup / after each optimizer step — NOT per forward call.
    """
    return dict(
        w1=params["w1"].astype(jnp.bfloat16), b1=params["b1"].astype(jnp.float32),
        w2n=params["w2n"].astype(jnp.bfloat16), b2=params["b2"].astype(jnp.float32),
        w3n=params["w3n"].astype(jnp.bfloat16), b3=params["b3"].astype(jnp.float32),
    )


def featurizer(s, env_name):
    """Column-slice featurizer (glue, matches the PyTorch featurizer)."""
    # TODO(synk): fuse this column slice into the x BlockSpec (element offset on
    # the feature axis) so the tiny (B, 2-3) featurized copy is never
    # materialized in HBM.
    if env_name == "hopper":
        return s[:, -6:-3]
    elif env_name == "fetch":
        return s[:, 0:3]
    elif env_name == "fetch_push":
        return s[:, 3:5]
    elif env_name == "finger":
        return s[:, 0:3]
    raise ValueError(env_name)


# ----------------------------------------------------------------------------
# References (pure JAX) for sanity checks
# ----------------------------------------------------------------------------
def reference_forward_f32(x, p):
    h = jnp.maximum(x @ p["w1"] + p["b1"], 0.0)
    h = jnp.maximum(h @ p["w2n"] + p["b2"], 0.0)
    return h @ p["w3n"] + p["b3"]


def reference_forward_bf16(x, p):
    """Mirrors the kernel's bf16-in / f32-accumulate arithmetic."""
    def mm(a, w):
        return jnp.dot(a.astype(jnp.bfloat16), w.astype(jnp.bfloat16),
                       preferred_element_type=jnp.float32)
    h = jnp.maximum(mm(x, p["w1"]) + p["b1"], 0.0)
    h = jnp.maximum(mm(h, p["w2n"]) + p["b2"], 0.0)
    return mm(h, p["w3n"]) + p["b3"]


if __name__ == "__main__":
    # Small, module-consistent sizes: env 'hopper', featurize=False.
    env_name = "hopper"
    featurize = False
    feature_dim = 3            # from env_name == 'hopper'
    state_dim = 32
    z_dim = 8
    batch = 16

    key = jax.random.PRNGKey(0)
    kparam, kin = jax.random.split(key)
    params = make_params(kparam, state_dim, z_dim, featurize, feature_dim)
    kparams = prepare_kernel_params(params)   # bf16 weights, cast once

    s = jax.random.normal(kin, (batch, state_dim), jnp.float32)
    x = featurizer(s, env_name) if featurize else s

    # batch=16 -> TB=8, 2 grid steps: exercises the resident-weight index maps,
    # the pipelined x/out tiles, and the v7x two-TensorCore split.
    out = discriminator_forward(
        x,
        kparams["w1"], kparams["b1"],
        kparams["w2n"], kparams["b2"],
        kparams["w3n"], kparams["b3"],
    )
    out = jax.block_until_ready(out)

    ref_bf16 = reference_forward_bf16(x, params)
    ref_f32 = reference_forward_f32(x, params)

    assert out.shape == (batch, z_dim), out.shape
    assert jnp.allclose(out, ref_bf16, atol=2e-2, rtol=2e-2), float(
        jnp.max(jnp.abs(out - ref_bf16)))
    assert jnp.allclose(out, ref_f32, atol=1e-1, rtol=1e-1), float(
        jnp.max(jnp.abs(out - ref_f32)))

    print("KERNEL_OK")
</pallas_src>

<mosaic_0001>
module attributes {stable_mosaic.version = 11 : i64} {
  func.func @_discriminator_kernel(%arg0: i32, %arg1: memref<8x32xf32, #tpu.memory_space<vmem>>, %arg2: memref<32x256xbf16, #tpu.memory_space<vmem>>, %arg3: memref<1x256xf32, #tpu.memory_space<vmem>>, %arg4: memref<256x64xbf16, #tpu.memory_space<vmem>>, %arg5: memref<1x64xf32, #tpu.memory_space<vmem>>, %arg6: memref<64x8xbf16, #tpu.memory_space<vmem>>, %arg7: memref<1x8xf32, #tpu.memory_space<vmem>>, %arg8: memref<8x8xf32, #tpu.memory_space<vmem>>) attributes {dimension_semantics = [#tpu.dimension_semantics<parallel>], iteration_bounds = array<i64: 2>, scalar_prefetch = 0 : i64, scratch_operands = 0 : i64, tpu.core_type = #tpu.core_type<tc>, window_params = [{transform_indices = @transform_0, window_bounds = array<i64: 8, 32>}, {pipeline_mode = #tpu.pipeline_mode<synchronous>, transform_indices = @transform_1, window_bounds = array<i64: 32, 256>}, {pipeline_mode = #tpu.pipeline_mode<synchronous>, transform_indices = @transform_2, window_bounds = array<i64: 1, 256>}, {pipeline_mode = #tpu.pipeline_mode<synchronous>, transform_indices = @transform_3, window_bounds = array<i64: 256, 64>}, {pipeline_mode = #tpu.pipeline_mode<synchronous>, transform_indices = @transform_4, window_bounds = array<i64: 1, 64>}, {pipeline_mode = #tpu.pipeline_mode<synchronous>, transform_indices = @transform_5, window_bounds = array<i64: 64, 8>}, {pipeline_mode = #tpu.pipeline_mode<synchronous>, transform_indices = @transform_6, window_bounds = array<i64: 1, 8>}, {transform_indices = @transform_7, window_bounds = array<i64: 8, 8>}]} {
    %c0 = arith.constant 0 : index
    %c0_0 = arith.constant 0 : index
    %0 = vector.load %arg1[%c0, %c0_0] : memref<8x32xf32, #tpu.memory_space<vmem>>, vector<8x32xf32>
    %1 = arith.truncf %0 : vector<8x32xf32> to vector<8x32xbf16>
    %c0_1 = arith.constant 0 : index
    %c0_2 = arith.constant 0 : index
    %2 = vector.load %arg2[%c0_1, %c0_2] : memref<32x256xbf16, #tpu.memory_space<vmem>>, vector<32x256xbf16>
    %cst = arith.constant dense<0.000000e+00> : vector<8x256xf32>
    %3 = tpu.matmul %1, %2, %cst {dimension_numbers = #tpu.dot_dimension_numbers<[1], [0], [0], [1], [0, 0, 1, 1], [], []>} : vector<8x32xbf16>, vector<32x256xbf16>, vector<8x256xf32> -> vector<8x256xf32>
    %c0_3 = arith.constant 0 : index
    %c0_4 = arith.constant 0 : index
    %4 = vector.load %arg3[%c0_3, %c0_4] : memref<1x256xf32, #tpu.memory_space<vmem>>, vector<1x256xf32>
    %5 = vector.broadcast %4 : vector<1x256xf32> to vector<8x256xf32>
    %6 = arith.addf %3, %5 : vector<8x256xf32>
    %cst_5 = arith.constant 0.000000e+00 : f32
    %7 = vector.broadcast %cst_5 : f32 to vector<8x256xf32>
    %8 = arith.maximumf %6, %7 : vector<8x256xf32>
    %9 = arith.truncf %8 : vector<8x256xf32> to vector<8x256xbf16>
    %c0_6 = arith.constant 0 : index
    %c0_7 = arith.constant 0 : index
    %10 = vector.load %arg4[%c0_6, %c0_7] : memref<256x64xbf16, #tpu.memory_space<vmem>>, vector<256x64xbf16>
    %cst_8 = arith.constant dense<0.000000e+00> : vector<8x64xf32>
    %11 = tpu.matmul %9, %10, %cst_8 {dimension_numbers = #tpu.dot_dimension_numbers<[1], [0], [0], [1], [0, 0, 1, 1], [], []>} : vector<8x256xbf16>, vector<256x64xbf16>, vector<8x64xf32> -> vector<8x64xf32>
    %c0_9 = arith.constant 0 : index
    %c0_10 = arith.constant 0 : index
    %12 = vector.load %arg5[%c0_9, %c0_10] : memref<1x64xf32, #tpu.memory_space<vmem>>, vector<1x64xf32>
    %13 = vector.broadcast %12 : vector<1x64xf32> to vector<8x64xf32>
    %14 = arith.addf %11, %13 : vector<8x64xf32>
    %cst_11 = arith.constant 0.000000e+00 : f32
    %15 = vector.broadcast %cst_11 : f32 to vector<8x64xf32>
    %16 = arith.maximumf %14, %15 : vector<8x64xf32>
    %17 = arith.truncf %16 : vector<8x64xf32> to vector<8x64xbf16>
    %c0_12 = arith.constant 0 : index
    %c0_13 = arith.constant 0 : index
    %18 = vector.load %arg6[%c0_12, %c0_13] : memref<64x8xbf16, #tpu.memory_space<vmem>>, vector<64x8xbf16>
    %cst_14 = arith.constant dense<0.000000e+00> : vector<8x8xf32>
    %19 = tpu.matmul %17, %18, %cst_14 {dimension_numbers = #tpu.dot_dimension_numbers<[1], [0], [0], [1], [0, 0, 1, 1], [], []>} : vector<8x64xbf16>, vector<64x8xbf16>, vector<8x8xf32> -> vector<8x8xf32>
    %c0_15 = arith.constant 0 : index
    %c0_16 = arith.constant 0 : index
    %20 = vector.load %arg7[%c0_15, %c0_16] : memref<1x8xf32, #tpu.memory_space<vmem>>, vector<1x8xf32>
    %21 = vector.broadcast %20 : vector<1x8xf32> to vector<8x8xf32>
    %22 = arith.addf %19, %21 : vector<8x8xf32>
    %c0_17 = arith.constant 0 : index
    %c0_18 = arith.constant 0 : index
    %23 = vector.load %arg8[%c0_17, %c0_18] : memref<8x8xf32, #tpu.memory_space<vmem>>, vector<8x8xf32>
    tpu.vector_store %arg8[%c0_17, %c0_18], %22 {strides = array<i32>} : memref<8x8xf32, #tpu.memory_space<vmem>>, vector<8x8xf32>,
    return
  }
  func.func @transform_0(%arg0: i32) -> (i32, i32) {
    %c0_i32 = arith.constant 0 : i32
    %c0_i32_0 = arith.constant 0 : i32
    return %arg0, %c0_i32 : i32, i32
  }
  func.func @transform_1(%arg0: i32) -> (i32, i32) {
    %c0_i32 = arith.constant 0 : i32
    %c0_i32_0 = arith.constant 0 : i32
    %c0_i32_1 = arith.constant 0 : i32
    return %c0_i32, %c0_i32_0 : i32, i32
  }
  func.func @transform_2(%arg0: i32) -> (i32, i32) {
    %c0_i32 = arith.constant 0 : i32
    %c0_i32_0 = arith.constant 0 : i32
    %c0_i32_1 = arith.constant 0 : i32
    return %c0_i32, %c0_i32_0 : i32, i32
  }
  func.func @transform_3(%arg0: i32) -> (i32, i32) {
    %c0_i32 = arith.constant 0 : i32
    %c0_i32_0 = arith.constant 0 : i32
    %c0_i32_1 = arith.constant 0 : i32
    return %c0_i32, %c0_i32_0 : i32, i32
  }
  func.func @transform_4(%arg0: i32) -> (i32, i32) {
    %c0_i32 = arith.constant 0 : i32
    %c0_i32_0 = arith.constant 0 : i32
    %c0_i32_1 = arith.constant 0 : i32
    return %c0_i32, %c0_i32_0 : i32, i32
  }
  func.func @transform_5(%arg0: i32) -> (i32, i32) {
    %c0_i32 = arith.constant 0 : i32
    %c0_i32_0 = arith.constant 0 : i32
    %c0_i32_1 = arith.constant 0 : i32
    return %c0_i32, %c0_i32_0 : i32, i32
  }
  func.func @transform_6(%arg0: i32) -> (i32, i32) {
    %c0_i32 = arith.constant 0 : i32
    %c0_i32_0 = arith.constant 0 : i32
    %c0_i32_1 = arith.constant 0 : i32
    return %c0_i32, %c0_i32_0 : i32, i32
  }
  func.func @transform_7(%arg0: i32) -> (i32, i32) {
    %c0_i32 = arith.constant 0 : i32
    %c0_i32_0 = arith.constant 0 : i32
    return %arg0, %c0_i32 : i32, i32
  }
}

</mosaic_0001>

<llo_original>
// kernel: tpu_custom_call.1
$region0: #{tpu_custom_call.1}
  #allocation0 [shape = 'u32[]', space=smem, size = 0x4, offset = 0x4, fixed_abs, tag = 'smem constant byte address 0x4 - core index']
  #allocation1 [shape = 'u32[72,128]{1,0:T(1,128)}', space=vmem, size = 0x9000, scoped, tag = 'internal scratch']
  %s0 = inlined_call_operand.vmem [shape: f32[16,32], index: 0, kind: input, shape index: {}]
  %s1 = inlined_call_operand.vmem [shape: bf16[32,256], index: 1, kind: input, shape index: {}]
  %s2 = inlined_call_operand.vmem [shape: f32[1,256], index: 2, kind: input, shape index: {}]
  %s3 = inlined_call_operand.vmem [shape: bf16[256,64], index: 3, kind: input, shape index: {}]
  %s4 = inlined_call_operand.vmem [shape: f32[1,64], index: 4, kind: input, shape index: {}]
  %s5 = inlined_call_operand.vmem [shape: bf16[64,8], index: 5, kind: input, shape index: {}]
  %s6 = inlined_call_operand.vmem [shape: f32[1,8], index: 6, kind: input, shape index: {}]
  %s7 = inlined_call_operand.vmem [shape: f32[16,8], index: 7, kind: output, shape index: {}]
  %s8 = sld [smem:[#allocation0]]
  $region61: #{tpu_custom_call.1} parent=0
    _
  %s10 = ssub.s32 1, %s8
  %s11 = scalar_select 0, %s10, %s8
  loop: start=0, step=1, limit=4
  $region2: #{tpu_custom_call.1} parent=0 // loop_pre_header
    _
  $region3: #{tpu_custom_call.1} parent=0 // loop_header
    %s13 = sphi 0, %s17
    %p14 = scmp.ge.s32.totalorder %s13, 4
    %s23 = sphi 0, %s25
    %s26 = sphi 0, %s23
    %s27 = sphi 0, %s26
    %s43 = sphi 0, %s27
    %s47 = sphi 0, %s47
    %s49 = sphi 0, %s47
    %s50 = sphi 0, %s49
    %s64 = sphi 0, %s50
    %s68 = sphi 0, %s68
    %s70 = sphi 0, %s68
    %s71 = sphi 0, %s70
    %s85 = sphi 0, %s71
    %s89 = sphi 0, %s89
    %s91 = sphi 0, %s89
    %s92 = sphi 0, %s91
    %s106 = sphi 0, %s92
    %s110 = sphi 0, %s110
    %s112 = sphi 0, %s110
    %s113 = sphi 0, %s112
    %s127 = sphi 0, %s113
    %s131 = sphi 0, %s131
    %s133 = sphi 0, %s131
    %s134 = sphi 0, %s133
    %s148 = sphi 0, %s134
    %s152 = sphi 0, %s152
    %s154 = sphi 0, %s152
    %s155 = sphi 0, %s154
    %s169 = sphi 0, %s155
    %s175 = sphi 0, %s177
    %s178 = sphi 0, %s175
    %s179 = sphi 0, %s178
    %s195 = sphi 0, %s179
  $region4: #{tpu_custom_call.1} parent=0 // loop_header_branch
    %16 = sbr.rel (%p14) target = $region8
  $region5: #{tpu_custom_call.1} parent=0 // loop_body
    %s18 = ssub.s32 %s13, 1
    %s19 = ssub.s32 %s13, 2
    %s20 = sadd.s32 %s13, 1
    %s21 = ssub.s32 %s13, %s20
    %p22 = scmp.eq.s32.totalorder %s21, 0
    %s24 = sadd.s32 %s23, 1
    %s25 = scalar_select %p22, %s23, %s24
    %p28 = pneg %p22
    %p29 = scmp.eq.s32.totalorder %s13, 1
    %p30 = por %p28, %p29
    %p31 = scmp.ne.s32.totalorder %s23, %s26
    %p32 = scmp.eq.s32.totalorder %s13, 0
    %p33 = por %p31, %p32
    %p34 = scmp.ne.s32.totalorder %s23, %s26
    %p35 = scmp.eq.s32.totalorder %s18, 1
    %p36 = por %p34, %p35
    %p37 = scmp.ne.s32.totalorder %s26, %s27
    %p38 = scmp.eq.s32.totalorder %s18, 0
    %p39 = por %p37, %p38
    %p40 = scmp.ne.s32.totalorder %s26, %s27
    %p41 = scmp.eq.s32.totalorder %s19, 1
    %p42 = por %p40, %p41
    %p44 = scmp.ne.s32.totalorder %s27, %s43
    %p45 = scmp.eq.s32.totalorder %s19, 0
    %p46 = por %p44, %p45
    %s48 = sadd.s32 %s47, 1
    %p51 = scmp.eq.s32.totalorder %s13, 1
    %p52 = scmp.ne.s32.totalorder %s47, %s49
    %p53 = scmp.eq.s32.totalorder %s13, 0
    %p54 = por %p52, %p53
    %p55 = scmp.ne.s32.totalorder %s47, %s49
    %p56 = scmp.eq.s32.totalorder %s18, 1
    %p57 = por %p55, %p56
    %p58 = scmp.ne.s32.totalorder %s49, %s50
    %p59 = scmp.eq.s32.totalorder %s18, 0
    %p60 = por %p58, %p59
    %p61 = scmp.ne.s32.totalorder %s49, %s50
    %p62 = scmp.eq.s32.totalorder %s19, 1
    %p63 = por %p61, %p62
    %p65 = scmp.ne.s32.totalorder %s50, %s64
    %p66 = scmp.eq.s32.totalorder %s19, 0
    %p67 = por %p65, %p66
    %s69 = sadd.s32 %s68, 1
    %p72 = scmp.eq.s32.totalorder %s13, 1
    %p73 = scmp.ne.s32.totalorder %s68, %s70
    %p74 = scmp.eq.s32.totalorder %s13, 0
    %p75 = por %p73, %p74
    %p76 = scmp.ne.s32.totalorder %s68, %s70
    %p77 = scmp.eq.s32.totalorder %s18, 1
    %p78 = por %p76, %p77
    %p79 = scmp.ne.s32.totalorder %s70, %s71
    %p80 = scmp.eq.s32.totalorder %s18, 0
    %p81 = por %p79, %p80
    %p82 = scmp.ne.s32.totalorder %s70, %s71
    %p83 = scmp.eq.s32.totalorder %s19, 1
    %p84 = por %p82, %p83
    %p86 = scmp.ne.s32.totalorder %s71, %s85
    %p87 = scmp.eq.s32.totalorder %s19, 0
    %p88 = por %p86, %p87
    %s90 = sadd.s32 %s89, 1
    %p93 = scmp.eq.s32.totalorder %s13, 1
    %p94 = scmp.ne.s32.totalorder %s89, %s91
    %p95 = scmp.eq.s32.totalorder %s13, 0
    %p96 = por %p94, %p95
    %p97 = scmp.ne.s32.totalorder %s89, %s91
    %p98 = scmp.eq.s32.totalorder %s18, 1
    %p99 = por %p97, %p98
    %p100 = scmp.ne.s32.totalorder %s91, %s92
    %p101 = scmp.eq.s32.totalorder %s18, 0
    %p102 = por %p100, %p101
    %p103 = scmp.ne.s32.totalorder %s91, %s92
    %p104 = scmp.eq.s32.totalorder %s19, 1
    %p105 = por %p103, %p104
    %p107 = scmp.ne.s32.totalorder %s92, %s106
    %p108 = scmp.eq.s32.totalorder %s19, 0
    %p109 = por %p107, %p108
    %s111 = sadd.s32 %s110, 1
    %p114 = scmp.eq.s32.totalorder %s13, 1
    %p115 = scmp.ne.s32.totalorder %s110, %s112
    %p116 = scmp.eq.s32.totalorder %s13, 0
    %p117 = por %p115, %p116
    %p118 = scmp.ne.s32.totalorder %s110, %s112
    %p119 = scmp.eq.s32.totalorder %s18, 1
    %p120 = por %p118, %p119
    %p121 = scmp.ne.s32.totalorder %s112, %s113
    %p122 = scmp.eq.s32.totalorder %s18, 0
    %p123 = por %p121, %p122
    %p124 = scmp.ne.s32.totalorder %s112, %s113
    %p125 = scmp.eq.s32.totalorder %s19, 1
    %p126 = por %p124, %p125
    %p128 = scmp.ne.s32.totalorder %s113, %s127
    %p129 = scmp.eq.s32.totalorder %s19, 0
    %p130 = por %p128, %p129
    %s132 = sadd.s32 %s131, 1
    %p135 = scmp.eq.s32.totalorder %s13, 1
    %p136 = scmp.ne.s32.totalorder %s131, %s133
    %p137 = scmp.eq.s32.totalorder %s13, 0
    %p138 = por %p136, %p137
    %p139 = scmp.ne.s32.totalorder %s131, %s133
    %p140 = scmp.eq.s32.totalorder %s18, 1
    %p141 = por %p139, %p140
    %p142 = scmp.ne.s32.totalorder %s133, %s134
    %p143 = scmp.eq.s32.totalorder %s18, 0
    %p144 = por %p142, %p143
    %p145 = scmp.ne.s32.totalorder %s133, %s134
    %p146 = scmp.eq.s32.totalorder %s19, 1
    %p147 = por %p145, %p146
    %p149 = scmp.ne.s32.totalorder %s134, %s148
    %p150 = scmp.eq.s32.totalorder %s19, 0
    %p151 = por %p149, %p150
    %s153 = sadd.s32 %s152, 1
    %p156 = scmp.eq.s32.totalorder %s13, 1
    %p157 = scmp.ne.s32.totalorder %s152, %s154
    %p158 = scmp.eq.s32.totalorder %s13, 0
    %p159 = por %p157, %p158
    %p160 = scmp.ne.s32.totalorder %s152, %s154
    %p161 = scmp.eq.s32.totalorder %s18, 1
    %p162 = por %p160, %p161
    %p163 = scmp.ne.s32.totalorder %s154, %s155
    %p164 = scmp.eq.s32.totalorder %s18, 0
    %p165 = por %p163, %p164
    %p166 = scmp.ne.s32.totalorder %s154, %s155
    %p167 = scmp.eq.s32.totalorder %s19, 1
    %p168 = por %p166, %p167
    %p170 = scmp.ne.s32.totalorder %s155, %s169
    %p171 = scmp.eq.s32.totalorder %s19, 0
    %p172 = por %p170, %p171
    %s173 = ssub.s32 %s13, %s20
    %p174 = scmp.eq.s32.totalorder %s173, 0
    %s176 = sadd.s32 %s175, 1
    %s177 = scalar_select %p174, %s175, %s176
    %p180 = pneg %p174
    %p181 = scmp.eq.s32.totalorder %s13, 1
    %p182 = por %p180, %p181
    %p183 = scmp.ne.s32.totalorder %s175, %s178
    %p184 = scmp.eq.s32.totalorder %s13, 0
    %p185 = por %p183, %p184
    %p186 = scmp.ne.s32.totalorder %s175, %s178
    %p187 = scmp.eq.s32.totalorder %s18, 1
    %p188 = por %p186, %p187
    %p189 = scmp.ne.s32.totalorder %s178, %s179
    %p190 = scmp.eq.s32.totalorder %s18, 0
    %p191 = por %p189, %p190
    %p192 = scmp.ne.s32.totalorder %s178, %s179
    %p193 = scmp.eq.s32.totalorder %s19, 1
    %p194 = por %p192, %p193
    %p196 = scmp.ne.s32.totalorder %s179, %s195
    %p197 = scmp.eq.s32.totalorder %s19, 0
    %p198 = por %p196, %p197
    %p199 = scmp.le.s32.totalorder 1, %s13
    %p200 = scmp.lt.s32.totalorder %s13, 3
    %p201 = pnand %p199, %p200
    %p202 = pneg %p201
    // Predicated region
    $region9: #{tpu_custom_call.1} parent=5 // pred_check
      _
    $region10: #{tpu_custom_call.1} parent=5 // pred_check_branch
      %204 = sbr.rel (%p201) target = $region12
    $region11: #{tpu_custom_call.1} parent=5 // pred_region
      %s205 = ssub.s32 %s13, 1
      // Predicated region
      $region13: #{tpu_custom_call.1} parent=11 // pred_check
        %p206 = pneg %p60
      $region14: #{tpu_custom_call.1} parent=11 // pred_check_branch
        %208 = sbr.rel (%p206) target = $region16
      $region15: #{tpu_custom_call.1} parent=11 // pred_region
        _
      $region16: #{tpu_custom_call.1} parent=11 // pred_fallthru
        _
      // Predicated region
      $region17: #{tpu_custom_call.1} parent=11 // pred_check
        %p209 = pneg %p81
      $region18: #{tpu_custom_call.1} parent=11 // pred_check_branch
        %211 = sbr.rel (%p209) target = $region20
      $region19: #{tpu_custom_call.1} parent=11 // pred_region
        _
      $region20: #{tpu_custom_call.1} parent=11 // pred_fallthru
        _
      // Predicated region
      $region21: #{tpu_custom_call.1} parent=11 // pred_check
        %p212 = pneg %p102
      $region22: #{tpu_custom_call.1} parent=11 // pred_check_branch
        %214 = sbr.rel (%p212) target = $region24
      $region23: #{tpu_custom_call.1} parent=11 // pred_region
        _
      $region24: #{tpu_custom_call.1} parent=11 // pred_fallthru
        _
      // Predicated region
      $region25: #{tpu_custom_call.1} parent=11 // pred_check
        %p215 = pneg %p123
      $region26: #{tpu_custom_call.1} parent=11 // pred_check_branch
        %217 = sbr.rel (%p215) target = $region28
      $region27: #{tpu_custom_call.1} parent=11 // pred_region
        _
      $region28: #{tpu_custom_call.1} parent=11 // pred_fallthru
        _
      // Predicated region
      $region29: #{tpu_custom_call.1} parent=11 // pred_check
        %p218 = pneg %p144
      $region30: #{tpu_custom_call.1} parent=11 // pred_check_branch
        %220 = sbr.rel (%p218) target = $region32
      $region31: #{tpu_custom_call.1} parent=11 // pred_region
        _
      $region32: #{tpu_custom_call.1} parent=11 // pred_fallthru
        _
      // Predicated region
      $region33: #{tpu_custom_call.1} parent=11 // pred_check
        %p221 = pneg %p165
      $region34: #{tpu_custom_call.1} parent=11 // pred_check_branch
        %223 = sbr.rel (%p221) target = $region36
      $region35: #{tpu_custom_call.1} parent=11 // pred_region
        _
      $region36: #{tpu_custom_call.1} parent=11 // pred_fallthru
        _
    $region12: #{tpu_custom_call.1} parent=5 // pred_fallthru
      _
    %p224 = scmp.lt.s32.totalorder %s13, 2
    // Predicated region
    $region37: #{tpu_custom_call.1} parent=5 // pred_check
      %p225 = pneg %p224
    $region38: #{tpu_custom_call.1} parent=5 // pred_check_branch
      %227 = sbr.rel (%p225) target = $region40
    $region39: #{tpu_custom_call.1} parent=5 // pred_region
      // Predicated region
      $region41: #{tpu_custom_call.1} parent=39 // pred_check
        %p228 = pneg %p33
      $region42: #{tpu_custom_call.1} parent=39 // pred_check_branch
        %230 = sbr.rel (%p228) target = $region44
      $region43: #{tpu_custom_call.1} parent=39 // pred_region
        %p231 = scmp.lt.s32.totalorder %s13, 1
        %s232 = scalar_select %p231, %s13, 1
        %s233 = smul.addr %s232, 8
        %s234 = scalar_lea.vmem %s0, %s233
      $region44: #{tpu_custom_call.1} parent=39 // pred_fallthru
        _
    $region40: #{tpu_custom_call.1} parent=5 // pred_fallthru
      _
    %p235 = scmp.le.s32.totalorder 1, %s13
    %p236 = scmp.lt.s32.totalorder %s13, 3
    %p237 = pnand %p235, %p236
    %p238 = pneg %p237
    // Predicated region
    $region45: #{tpu_custom_call.1} parent=5 // pred_check
      _
    $region46: #{tpu_custom_call.1} parent=5 // pred_check_branch
      %240 = sbr.rel (%p237) target = $region48
    $region47: #{tpu_custom_call.1} parent=5 // pred_region
      %s241 = ssub.s32 %s13, 1
      %p242 = scmp.lt.s32.totalorder %s18, 1
      %s243 = scalar_select %p242, %s18, 1
      %s244 = smul.addr %s243, 8
      %s245 = scalar_lea.vmem %s0, %s244
      %p246 = pneg %p39
      %p247 = pneg %p36
      %p248 = pneg %p60
      %p249 = pneg %p57
      %p250 = pneg %p81
      %p251 = pneg %p78
      %p252 = pneg %p102
      %p253 = pneg %p99
      %p254 = pneg %p123
      %p255 = pneg %p120
      %p256 = pneg %p144
      %p257 = pneg %p141
      %p258 = pneg %p165
      %p259 = pneg %p162
      %p260 = pneg %p191
      %p261 = pneg %p188
      %p262 = scmp.lt.s32.totalorder %s18, 1
      %s263 = scalar_select %p262, %s18, 1
      %s264 = smul.addr %s263, 8
      %s265 = scalar_lea.vmem %s7, %s264
      %p266 = scmp.lt.s32.totalorder %s18, 1
      %s267 = scalar_select %p266, %s18, 1
      %s268 = smul.addr %s267, 8
      %s269 = scalar_lea.vmem %s0, %s268
      %p270 = scmp.lt.s32.totalorder %s18, 1
      %s271 = scalar_select %p270, %s18, 1
      %s272 = smul.addr %s271, 8
      %s273 = scalar_lea.vmem %s7, %s272
      %v275 = vld [vmem:[%s269] sm:$0xff]
      %v276 = vpack.c.bf16 %v275, %v275
      %v277 = vld [vmem:[%s1] sm:$0xff]
      %v278 = vld [vmem:[%s1 + $0x8] sm:$0xff]
      %v279 = vld [vmem:[%s1 + $0x10] sm:$0xff]
      %v280 = vld [vmem:[%s1 + $0x18] sm:$0xff]
      %v281 = vld [vmem:[%s2] sm:$0x3]
      %v283 = vperm.slane %v281, 0
      %v284 = vperm.slane %v281, 1
      %v291 = vunpack.c.l.b16 %v277
      %v292 = vunpack.c.h.b16 %v277
      %v293 = vunpack.c.l.b16 %v278
      %v294 = vunpack.c.h.b16 %v278
      %v295 = vunpack.c.l.b16 %v279
      %v296 = vunpack.c.h.b16 %v279
      %v297 = vunpack.c.l.b16 %v280
      %v298 = vunpack.c.h.b16 %v280
      %v299 = vpack.c.b16 %v293, %v291
      %v300 = vpack.c.b16 %v294, %v292
      %v301 = vpack.c.b16 %v297, %v295
      %v302 = vpack.c.b16 %v298, %v296
      %vm307 = vcmask 261120
      %v309 = vsel %vm307, %v276, 0
      %311 = vmatpush.bf16.msra.mxu0 0
      %312 = vmatpush.bf16.msra.mxu0 0
      %313 = vmatpush.bf16.msra.mxu0 0
      %314 = vmatpush.bf16.msra.mxu0 0
      %315 = vmatpush.bf16.msra.mxu0 0
      %316 = vmatpush.bf16.msra.mxu0 0
      %317 = vmatpush.bf16.msra.mxu0 %v301
      %318 = vmatpush.bf16.msra.mxu0 %v299
      %319 = vmatmul.bf16.gmra.mxu0 %v309
      %v320 = vpop.f32.mrf.mxu0
      %v321 = vadd.f32 %v283, %v320
      %v322 = vpop.f32.mrf.mxu0
      %323 = vdwg.mxu0
      %324 = vmatpush.bf16.msra.mxu0 0
      %325 = vmatpush.bf16.msra.mxu0 0
      %326 = vmatpush.bf16.msra.mxu0 0
      %327 = vmatpush.bf16.msra.mxu0 0
      %328 = vmatpush.bf16.msra.mxu0 0
      %329 = vmatpush.bf16.msra.mxu0 0
      %330 = vmatpush.bf16.msra.mxu0 %v302
      %331 = vmatpush.bf16.msra.mxu0 %v300
      %332 = vmatmul.bf16.gmra.mxu0 %v309
      %v333 = vpop.f32.mrf.mxu0
      %v334 = vadd.f32 %v284, %v333
      %v335 = vpop.f32.mrf.mxu0
      %336 = vdwg.mxu0
      %v337 = vmax.f32 %v321, 0.0
      %v338 = vmax.f32 %v334, 0.0
      %v339 = vpack.c.bf16 %v337, %v337
      %v340 = vpack.c.bf16 %v338, %v338
      %v341 = vld [vmem:[%s3] sm:$0xf]
      %v342 = vld [vmem:[%s3 + $0x4] sm:$0xf]
      %v343 = vld [vmem:[%s3 + $0x8] sm:$0xf]
      %v344 = vld [vmem:[%s3 + $0xc] sm:$0xf]
      %v345 = vld [vmem:[%s3 + $0x10] sm:$0xf]
      %v346 = vld [vmem:[%s3 + $0x14] sm:$0xf]
      %v347 = vld [vmem:[%s3 + $0x18] sm:$0xf]
      %v348 = vld [vmem:[%s3 + $0x1c] sm:$0xf]
      %v349 = vld [vmem:[%s3 + $0x20] sm:$0xf]
      %v350 = vld [vmem:[%s3 + $0x24] sm:$0xf]
      %v351 = vld [vmem:[%s3 + $0x28] sm:$0xf]
      %v352 = vld [vmem:[%s3 + $0x2c] sm:$0xf]
      %v353 = vld [vmem:[%s3 + $0x30] sm:$0xf]
      %v354 = vld [vmem:[%s3 + $0x34] sm:$0xf]
      %v355 = vld [vmem:[%s3 + $0x38] sm:$0xf]
      %v356 = vld [vmem:[%s3 + $0x3c] sm:$0xf]
      %v357 = vld [vmem:[%s3 + $0x40] sm:$0xf]
      %v358 = vld [vmem:[%s3 + $0x44] sm:$0xf]
      %v359 = vld [vmem:[%s3 + $0x48] sm:$0xf]
      %v360 = vld [vmem:[%s3 + $0x4c] sm:$0xf]
      %v361 = vld [vmem:[%s3 + $0x50] sm:$0xf]
      %v362 = vld [vmem:[%s3 + $0x54] sm:$0xf]
      %v363 = vld [vmem:[%s3 + $0x58] sm:$0xf]
      %v364 = vld [vmem:[%s3 + $0x5c] sm:$0xf]
      %v365 = vld [vmem:[%s3 + $0x60] sm:$0xf]
      %v366 = vld [vmem:[%s3 + $0x64] sm:$0xf]
      %v367 = vld [vmem:[%s3 + $0x68] sm:$0xf]
      %v368 = vld [vmem:[%s3 + $0x6c] sm:$0xf]
      %v369 = vld [vmem:[%s3 + $0x70] sm:$0xf]
      %v370 = vld [vmem:[%s3 + $0x74] sm:$0xf]
      %v371 = vld [vmem:[%s3 + $0x78] sm:$0xf]
      %v372 = vld [vmem:[%s3 + $0x7c] sm:$0xf]
      %v373 = vld [vmem:[%s4] sm:$0x1]
      %v375 = vperm.slane %v373, 0
      %v409 = vunpack.c.l.b16 %v341
      %v410 = vunpack.c.l.b16 %v342
      %v411 = vunpack.c.l.b16 %v343
      %v412 = vunpack.c.l.b16 %v344
      %v413 = vunpack.c.l.b16 %v345
      %v414 = vunpack.c.l.b16 %v346
      %v415 = vunpack.c.l.b16 %v347
      %v416 = vunpack.c.l.b16 %v348
      %v417 = vunpack.c.l.b16 %v349
      %v418 = vunpack.c.l.b16 %v350
      %v419 = vunpack.c.l.b16 %v351
      %v420 = vunpack.c.l.b16 %v352
      %v421 = vunpack.c.l.b16 %v353
      %v422 = vunpack.c.l.b16 %v354
      %v423 = vunpack.c.l.b16 %v355
      %v424 = vunpack.c.l.b16 %v356
      %v425 = vunpack.c.l.b16 %v357
      %v426 = vunpack.c.l.b16 %v358
      %v427 = vunpack.c.l.b16 %v359
      %v428 = vunpack.c.l.b16 %v360
      %v429 = vunpack.c.l.b16 %v361
      %v430 = vunpack.c.l.b16 %v362
      %v431 = vunpack.c.l.b16 %v363
      %v432 = vunpack.c.l.b16 %v364
      %v433 = vunpack.c.l.b16 %v365
      %v434 = vunpack.c.l.b16 %v366
      %v435 = vunpack.c.l.b16 %v367
      %v436 = vunpack.c.l.b16 %v368
      %v437 = vunpack.c.l.b16 %v369
      %v438 = vunpack.c.l.b16 %v370
      %v439 = vunpack.c.l.b16 %v371
      %v440 = vunpack.c.l.b16 %v372
      %v441 = vpack.c.b16 %v410, %v409
      %v442 = vpack.c.b16 %v412, %v411
      %v443 = vpack.c.b16 %v414, %v413
      %v444 = vpack.c.b16 %v416, %v415
      %v445 = vpack.c.b16 %v418, %v417
      %v446 = vpack.c.b16 %v420, %v419
      %v447 = vpack.c.b16 %v422, %v421
      %v448 = vpack.c.b16 %v424, %v423
      %v449 = vpack.c.b16 %v426, %v425
      %v450 = vpack.c.b16 %v428, %v427
      %v451 = vpack.c.b16 %v430, %v429
      %v452 = vpack.c.b16 %v432, %v431
      %v453 = vpack.c.b16 %v434, %v433
      %v454 = vpack.c.b16 %v436, %v435
      %v455 = vpack.c.b16 %v438, %v437
      %v456 = vpack.c.b16 %v440, %v439
      %473 = vmatpush.bf16.msra.mxu0 %v448
      %474 = vmatpush.bf16.msra.mxu0 %v447
      %475 = vmatpush.bf16.msra.mxu0 %v446
      %476 = vmatpush.bf16.msra.mxu0 %v445
      %477 = vmatpush.bf16.msra.mxu0 %v444
      %478 = vmatpush.bf16.msra.mxu0 %v443
      %479 = vmatpush.bf16.msra.mxu0 %v442
      %480 = vmatpush.bf16.msra.mxu0 %v441
      %481 = vmatmul.bf16.gmra.mxu0 %v339
      %v482 = vpop.f32.mrf.mxu0
      %v483 = vadd.f32 %v375, %v482
      %v484 = vpop.f32.mrf.mxu0
      %485 = vdwg.mxu0
      %486 = vmatpush.bf16.msra.mxu0 %v456
      %487 = vmatpush.bf16.msra.mxu0 %v455
      %488 = vmatpush.bf16.msra.mxu0 %v454
      %489 = vmatpush.bf16.msra.mxu0 %v453
      %490 = vmatpush.bf16.msra.mxu0 %v452
      %491 = vmatpush.bf16.msra.mxu0 %v451
      %492 = vmatpush.bf16.msra.mxu0 %v450
      %493 = vmatpush.bf16.msra.mxu0 %v449
      %494 = vmatmul.bf16.gmra.mxu0 %v340
      %v495 = vpop.f32.mrf.mxu0
      %v496 = vadd.f32 %v483, %v495
      %v497 = vpop.f32.mrf.mxu0
      %498 = vdwg.mxu0
      %v499 = vmax.f32 %v496, 0.0
      %v500 = vpack.c.bf16 %v499, %v499
      %v501 = vld [vmem:[%s5] sm:$0xf]
      %v502 = vld [vmem:[%s5 + $0x4] sm:$0xf]
      %v503 = vld [vmem:[%s5 + $0x8] sm:$0xf]
      %v504 = vld [vmem:[%s5 + $0xc] sm:$0xf]
      %v505 = vld [vmem:[%s5 + $0x10] sm:$0xf]
      %v506 = vld [vmem:[%s5 + $0x14] sm:$0xf]
      %v507 = vld [vmem:[%s5 + $0x18] sm:$0xf]
      %v508 = vld [vmem:[%s5 + $0x1c] sm:$0xf]
      %v509 = vld [vmem:[%s6] sm:$0x1]
      %v511 = vperm.slane %v509, 0
      %v521 = vunpack.c.l.b16 %v501
      %v522 = vunpack.c.l.b16 %v502
      %v523 = vunpack.c.l.b16 %v503
      %v524 = vunpack.c.l.b16 %v504
      %v525 = vunpack.c.l.b16 %v505
      %v526 = vunpack.c.l.b16 %v506
      %v527 = vunpack.c.l.b16 %v507
      %v528 = vunpack.c.l.b16 %v508
      %v529 = vpack.c.b16 %v522, %v521
      %v530 = vpack.c.b16 %v524, %v523
      %v531 = vpack.c.b16 %v526, %v525
      %v532 = vpack.c.b16 %v528, %v527
      %vm537 = vcmask 523264
      %v539 = vsel %vm537, %v500, 0
      %541 = vmatpush.bf16.msra.mxu0 0
      %542 = vmatpush.bf16.msra.mxu0 0
      %543 = vmatpush.bf16.msra.mxu0 0
      %544 = vmatpush.bf16.msra.mxu0 0
      %545 = vmatpush.bf16.msra.mxu0 %v532
      %546 = vmatpush.bf16.msra.mxu0 %v531
      %547 = vmatpush.bf16.msra.mxu0 %v530
      %548 = vmatpush.bf16.msra.mxu0 %v529
      %549 = vmatmul.bf16.gmra.mxu0 %v539
      %v550 = vpop.f32.mrf.mxu0
      %v551 = vadd.f32 %v511, %v550
      %v552 = vpop.f32.mrf.mxu0
      %553 = vdwg.mxu0
      %vm554 = vcmask 64512
      %555 = vst.msk [vmem:[%s273] sm:$0xff] %vm554, %v551
      %p556 = scmp.lt.s32.totalorder %s18, 1
      %s557 = scalar_select %p556, %s18, 1
      %s558 = smul.addr %s557, 8
      %s559 = scalar_lea.vmem %s7, %s558
      // Predicated region
      $region49: #{tpu_custom_call.1} parent=47 // pred_check
        %p560 = pneg %p188
      $region50: #{tpu_custom_call.1} parent=47 // pred_check_branch
        %562 = sbr.rel (%p560) target = $region52
      $region51: #{tpu_custom_call.1} parent=47 // pred_region
        _
      $region52: #{tpu_custom_call.1} parent=47 // pred_fallthru
        _
    $region48: #{tpu_custom_call.1} parent=5 // pred_fallthru
      _
    %p563 = scmp.le.s32.totalorder 2, %s13
    // Predicated region
    $region53: #{tpu_custom_call.1} parent=5 // pred_check
      %p564 = pneg %p563
    $region54: #{tpu_custom_call.1} parent=5 // pred_check_branch
      %566 = sbr.rel (%p564) target = $region56
    $region55: #{tpu_custom_call.1} parent=5 // pred_region
      %s567 = ssub.s32 %s13, 2
      // Predicated region
      $region57: #{tpu_custom_call.1} parent=55 // pred_check
        %p568 = pneg %p194
      $region58: #{tpu_custom_call.1} parent=55 // pred_check_branch
        %570 = sbr.rel (%p568) target = $region60
      $region59: #{tpu_custom_call.1} parent=55 // pred_region
        %p571 = scmp.lt.s32.totalorder %s19, 1
        %s572 = scalar_select %p571, %s19, 1
        %s573 = smul.addr %s572, 8
        %s574 = scalar_lea.vmem %s7, %s573
      $region60: #{tpu_custom_call.1} parent=55 // pred_fallthru
        _
    $region56: #{tpu_custom_call.1} parent=5 // pred_fallthru
      _
  $region6: #{tpu_custom_call.1} parent=0 // loop_footer
    %s17 = sadd.s32 1, %s13
  $region7: #{tpu_custom_call.1} parent=0 // loop_footer_branch
    %12 = sbr.rel target = $region3
  $region8: #{tpu_custom_call.1} parent=0 // loop_exit
    _

</llo_original>
